<compile_context>
chip_gen: v5e
topology: v5e:2x2
jax: 0.10.0
libtpu: 0.0.40
codegen_flags: <defaults>
</compile_context>

<pallas_src>
import functools

import numpy as np

import jax
import jax.numpy as jnp
from jax.experimental import pallas as pl
from jax.experimental.pallas import tpu as pltpu


def conv_bn_relu_kernel(x_ref, w_ref, b_ref, m_ref, o_ref, xbig_ref, patches_ref,
                        *, H, W, C_in, K, pad, KKC):
    """One image per grid step.

    x_ref:       (1, C_in, H*W)       f32  flat NCHW image (free reshape)
    w_ref:       (C_out_p, KKC_pad)   bf16 im2col weights, BN scale pre-folded
    b_ref:       (C_out_p, 1)         f32  folded BN bias = beta - mean*scale
    m_ref:       (K, H*W)             bf16 0/1 column-validity masks (per kx)
    o_ref:       (1, C_out_p, H*W)    bf16 NCHW-flat output (lane-dense)
    xbig_ref:    (C_in, H*W + 2*HALO) bf16 per-channel halo buffer
    patches_ref: (KKC_pad, H*W)       bf16 im2col^T scratch
    """
    HW = H * W
    HALO = pad * W + pad

    # Stage the image (bf16) into a flat per-channel buffer with zero halos so
    # every conv tap is a static lane-slice load.  Row out-of-range positions
    # read the zero halo; column wrap is handled by the mask input below.
    xbig_ref[:, :HALO] = jnp.zeros((C_in, HALO), jnp.bfloat16)
    xbig_ref[:, HALO + HW:] = jnp.zeros((C_in, HALO), jnp.bfloat16)
    xbig_ref[:, HALO:HALO + HW] = x_ref[0].astype(jnp.bfloat16)

    # Zero only the padded contraction rows (their weight rows are zero, but
    # uninitialized VMEM garbage could be NaN and NaN*0 != 0).
    KKC_pad = patches_ref.shape[0]
    if KKC_pad > KKC:
        patches_ref[KKC:, :] = jnp.zeros((KKC_pad - KKC, HW), jnp.bfloat16)

    # im2col^T: patches[t*C_in + ci, p] = x[ci, p + (ky-pad)*W + (kx-pad)]
    # (zero outside the image).  Static-offset, full-lane-width scratch stores.
    for ky in range(K):
        for kx in range(K):
            t = ky * K + kx
            s = (ky - pad) * W + (kx - pad)
            tap = xbig_ref[:, HALO + s:HALO + s + HW]            # (C_in, HW) bf16
            if kx != pad:                                        # border column wrap
                tap = tap * m_ref[kx:kx + 1, :]
            patches_ref[t * C_in:(t + 1) * C_in, :] = tap

    # One MXU matmul per image, f32 accumulation.
    acc = jnp.dot(w_ref[...], patches_ref[...],
                  preferred_element_type=jnp.float32)            # (C_out_p, HW) f32

    # Folded BN (scale already in the weights) -> bias add + ReLU, bf16 store.
    o_ref[0] = jnp.maximum(acc + b_ref[...], 0.0).astype(o_ref.dtype)


def conv_block(x_nchw, weight_oihw, gamma, beta, running_mean, running_var, eps=1e-5):
    """Forward of ConvBlock.  Input NCHW f32, output NCHW bf16 (f32 accumulation)."""
    N, C_in, H, W = x_nchw.shape
    C_out, C_in_w, K, K2 = weight_oihw.shape
    assert C_in_w == C_in and K == K2
    assert K % 2 == 1, "symmetric 'same' padding assumes odd kernel size"
    pad = (K - 1) // 2
    HW = H * W
    HALO = pad * W + pad
    KKC = K * K * C_in

    KKC_pad = ((KKC + 15) // 16) * 16        # bf16 sublane pack / MXU-friendly K dim
    C_out_p = ((C_out + 7) // 8) * 8         # sublane-aligned output channels

    # --- glue: BN folding + weight layout (tiny, one-time; no activation pass) ---
    scale = (gamma / jnp.sqrt(running_var + eps)).astype(jnp.float32)     # (C_out,)
    bias = (beta - running_mean * scale).astype(jnp.float32)              # (C_out,)

    # (C_out, C_in, K, K) -> (C_out, K, K, C_in) -> (C_out, K*K*C_in), fold scale, pad.
    w_mat = jnp.transpose(weight_oihw, (0, 2, 3, 1)).astype(jnp.float32)
    w_mat = w_mat.reshape(C_out, KKC) * scale[:, None]
    w_mat = jnp.pad(w_mat, ((0, C_out_p - C_out), (0, KKC_pad - KKC))).astype(jnp.bfloat16)

    bias_col = jnp.pad(bias, (0, C_out_p - C_out)).reshape(C_out_p, 1).astype(jnp.float32)

    # Column-validity masks per kx (host-side constants; zero activation traffic).
    col = np.arange(HW) % W
    masks_np = np.stack(
        [((col + (kx - pad) >= 0) & (col + (kx - pad) < W)).astype(np.float32)
         for kx in range(K)])                                            # (K, HW)
    masks = jnp.asarray(masks_np, dtype=jnp.bfloat16)

    # Activations: free reshape of contiguous NCHW; no wrapper transpose / cast pass.
    x_flat = x_nchw.reshape(N, C_in, HW)

    kernel = functools.partial(conv_bn_relu_kernel,
                               H=H, W=W, C_in=C_in, K=K, pad=pad, KKC=KKC)

    cost = pl.CostEstimate(
        flops=2 * N * H * W * K * K * C_in * C_out,
        transcendentals=0,
        bytes_accessed=(N * C_in * HW * 4            # f32 activations in
                        + C_out_p * KKC_pad * 2      # bf16 weights
                        + C_out_p * 4                # f32 bias
                        + K * HW * 2                 # bf16 masks
                        + N * C_out_p * HW * 2),     # bf16 output
    )

    out = pl.pallas_call(
        kernel,
        out_shape=jax.ShapeDtypeStruct((N, C_out_p, HW), jnp.bfloat16),
        grid_spec=pltpu.PrefetchScalarGridSpec(
            num_scalar_prefetch=0,
            grid=(N,),
            in_specs=[
                pl.BlockSpec((1, C_in, HW), lambda n: (n, 0, 0)),
                pl.BlockSpec((C_out_p, KKC_pad), lambda n: (0, 0)),
                pl.BlockSpec((C_out_p, 1), lambda n: (0, 0)),
                pl.BlockSpec((K, HW), lambda n: (0, 0)),
            ],
            out_specs=pl.BlockSpec((1, C_out_p, HW), lambda n: (n, 0, 0)),
            scratch_shapes=[
                pltpu.VMEM((C_in, HW + 2 * HALO), jnp.bfloat16),   # halo buffer
                pltpu.VMEM((KKC_pad, HW), jnp.bfloat16),           # im2col^T patches
            ],
        ),
        compiler_params=pltpu.CompilerParams(
            dimension_semantics=("parallel",),
            vmem_limit_bytes=32 * 1024 * 1024,
        ),
        cost_estimate=cost,
    )(x_flat, w_mat, bias_col, masks)

    out = out.reshape(N, C_out_p, H, W)          # free reshape, already NCHW
    if C_out_p != C_out:
        out = out[:, :C_out]
    return out


def reference(x_nchw, weight_oihw, gamma, beta, running_mean, running_var, eps=1e-5):
    """Pure-JAX f32 reference (lax conv + eval-mode BN + ReLU), NCHW."""
    K = weight_oihw.shape[-1]
    p = (K - 1) // 2
    y = jax.lax.conv_general_dilated(
        x_nchw.astype(jnp.float32),
        weight_oihw.astype(jnp.float32),
        window_strides=(1, 1),
        padding=((p, p), (p, p)),
        dimension_numbers=("NCHW", "OIHW", "NCHW"),
    )
    scale = gamma / jnp.sqrt(running_var + eps)
    bias = beta - running_mean * scale
    y = y * scale[None, :, None, None] + bias[None, :, None, None]
    return jnp.maximum(y, 0.0)


if __name__ == "__main__":
    key = jax.random.PRNGKey(0)
    k_x, k_w, k_g, k_b, k_m, k_v = jax.random.split(key, 6)

    N, C_in, H, W = 2, 4, 16, 16
    C_out, K = 8, 3

    x = jax.random.normal(k_x, (N, C_in, H, W), dtype=jnp.float32)
    weight = jax.random.normal(k_w, (C_out, C_in, K, K), dtype=jnp.float32) * 0.1
    gamma = jax.random.uniform(k_g, (C_out,), minval=0.5, maxval=1.5, dtype=jnp.float32)
    beta = jax.random.normal(k_b, (C_out,), dtype=jnp.float32) * 0.1
    running_mean = jax.random.normal(k_m, (C_out,), dtype=jnp.float32) * 0.1
    running_var = jax.random.uniform(k_v, (C_out,), minval=0.5, maxval=1.5, dtype=jnp.float32)

    out = conv_block(x, weight, gamma, beta, running_mean, running_var)
    out = jax.block_until_ready(out)

    ref = reference(x, weight, gamma, beta, running_mean, running_var)
    assert out.shape == (N, C_out, H, W), out.shape

    # Tolerance covers bf16 rounding of activations/weights/output
    # (accumulation itself is f32 via preferred_element_type).
    out_f32 = out.astype(jnp.float32)
    max_diff = float(jnp.max(jnp.abs(out_f32 - ref)))
    assert jnp.allclose(out_f32, ref, atol=5e-2, rtol=5e-2), (
        "mismatch vs reference, max abs diff = %f" % max_diff)

    print("KERNEL_OK")
</pallas_src>

<mosaic_0001>
module attributes {stable_mosaic.version = 11 : i64} {
  func.func @conv_bn_relu_kernel(%arg0: i32, %arg1: memref<1x4x256xf32, #tpu.memory_space<vmem>>, %arg2: memref<8x48xbf16, #tpu.memory_space<vmem>>, %arg3: memref<8x1xf32, #tpu.memory_space<vmem>>, %arg4: memref<3x256xbf16, #tpu.memory_space<vmem>>, %arg5: memref<1x8x256xbf16, #tpu.memory_space<vmem>>, %arg6: memref<4x290xbf16, #tpu.memory_space<vmem>>, %arg7: memref<48x256xbf16, #tpu.memory_space<vmem>>) attributes {dimension_semantics = [#tpu.dimension_semantics<parallel>], iteration_bounds = array<i64: 2>, scalar_prefetch = 0 : i64, scratch_operands = 2 : i64, tpu.core_type = #tpu.core_type<tc>, window_params = [{transform_indices = @transform_0, window_bounds = array<i64: 1, 4, 256>}, {pipeline_mode = #tpu.pipeline_mode<synchronous>, transform_indices = @transform_1, window_bounds = array<i64: 8, 48>}, {pipeline_mode = #tpu.pipeline_mode<synchronous>, transform_indices = @transform_2, window_bounds = array<i64: 8, 1>}, {pipeline_mode = #tpu.pipeline_mode<synchronous>, transform_indices = @transform_3, window_bounds = array<i64: 3, 256>}, {transform_indices = @transform_4, window_bounds = array<i64: 1, 8, 256>}]} {
    %cst = arith.constant 0.000000e+00 : bf16
    %0 = vector.broadcast %cst : bf16 to vector<4x17xbf16>
    %c0 = arith.constant 0 : index
    %c0_0 = arith.constant 0 : index
    %1 = vector.load %arg6[%c0, %c0_0] : memref<4x290xbf16, #tpu.memory_space<vmem>>, vector<4x17xbf16>
    tpu.vector_store %arg6[%c0, %c0_0], %0 {strides = array<i32>} : memref<4x290xbf16, #tpu.memory_space<vmem>>, vector<4x17xbf16>,
    %cst_1 = arith.constant 0.000000e+00 : bf16
    %2 = vector.broadcast %cst_1 : bf16 to vector<4x17xbf16>
    %c0_2 = arith.constant 0 : index
    %c273 = arith.constant 273 : index
    %3 = vector.load %arg6[%c0_2, %c273] : memref<4x290xbf16, #tpu.memory_space<vmem>>, vector<4x17xbf16>
    tpu.vector_store %arg6[%c0_2, %c273], %2 {strides = array<i32>} : memref<4x290xbf16, #tpu.memory_space<vmem>>, vector<4x17xbf16>,
    %c0_3 = arith.constant 0 : index
    %c0_4 = arith.constant 0 : index
    %c0_5 = arith.constant 0 : index
    %4 = vector.load %arg1[%c0_3, %c0_4, %c0_5] : memref<1x4x256xf32, #tpu.memory_space<vmem>>, vector<1x4x256xf32>
    %5 = vector.shape_cast %4 : vector<1x4x256xf32> to vector<4x256xf32>
    %6 = arith.truncf %5 : vector<4x256xf32> to vector<4x256xbf16>
    %c0_6 = arith.constant 0 : index
    %c17 = arith.constant 17 : index
    %7 = vector.load %arg6[%c0_6, %c17] : memref<4x290xbf16, #tpu.memory_space<vmem>>, vector<4x256xbf16>
    tpu.vector_store %arg6[%c0_6, %c17], %6 {strides = array<i32>} : memref<4x290xbf16, #tpu.memory_space<vmem>>, vector<4x256xbf16>,
    %cst_7 = arith.constant 0.000000e+00 : bf16
    %8 = vector.broadcast %cst_7 : bf16 to vector<12x256xbf16>
    %c36 = arith.constant 36 : index
    %c0_8 = arith.constant 0 : index
    %9 = vector.load %arg7[%c36, %c0_8] : memref<48x256xbf16, #tpu.memory_space<vmem>>, vector<12x256xbf16>
    tpu.vector_store %arg7[%c36, %c0_8], %8 {strides = array<i32>} : memref<48x256xbf16, #tpu.memory_space<vmem>>, vector<12x256xbf16>,
    %c0_9 = arith.constant 0 : index
    %c0_10 = arith.constant 0 : index
    %10 = vector.load %arg6[%c0_9, %c0_10] : memref<4x290xbf16, #tpu.memory_space<vmem>>, vector<4x256xbf16>
    %c0_11 = arith.constant 0 : index
    %c0_12 = arith.constant 0 : index
    %11 = vector.load %arg4[%c0_11, %c0_12] : memref<3x256xbf16, #tpu.memory_space<vmem>>, vector<1x256xbf16>
    %12 = vector.broadcast %11 : vector<1x256xbf16> to vector<4x256xbf16>
    %13 = arith.mulf %10, %12 : vector<4x256xbf16>
    %c0_13 = arith.constant 0 : index
    %c0_14 = arith.constant 0 : index
    %14 = vector.load %arg7[%c0_13, %c0_14] : memref<48x256xbf16, #tpu.memory_space<vmem>>, vector<4x256xbf16>
    tpu.vector_store %arg7[%c0_13, %c0_14], %13 {strides = array<i32>} : memref<48x256xbf16, #tpu.memory_space<vmem>>, vector<4x256xbf16>,
    %c0_15 = arith.constant 0 : index
    %c1 = arith.constant 1 : index
    %15 = vector.load %arg6[%c0_15, %c1] : memref<4x290xbf16, #tpu.memory_space<vmem>>, vector<4x256xbf16>
    %c4 = arith.constant 4 : index
    %c0_16 = arith.constant 0 : index
    %16 = vector.load %arg7[%c4, %c0_16] : memref<48x256xbf16, #tpu.memory_space<vmem>>, vector<4x256xbf16>
    tpu.vector_store %arg7[%c4, %c0_16], %15 {strides = array<i32>} : memref<48x256xbf16, #tpu.memory_space<vmem>>, vector<4x256xbf16>,
    %c0_17 = arith.constant 0 : index
    %c2 = arith.constant 2 : index
    %17 = vector.load %arg6[%c0_17, %c2] : memref<4x290xbf16, #tpu.memory_space<vmem>>, vector<4x256xbf16>
    %c2_18 = arith.constant 2 : index
    %c0_19 = arith.constant 0 : index
    %18 = vector.load %arg4[%c2_18, %c0_19] : memref<3x256xbf16, #tpu.memory_space<vmem>>, vector<1x256xbf16>
    %19 = vector.broadcast %18 : vector<1x256xbf16> to vector<4x256xbf16>
    %20 = arith.mulf %17, %19 : vector<4x256xbf16>
    %c8 = arith.constant 8 : index
    %c0_20 = arith.constant 0 : index
    %21 = vector.load %arg7[%c8, %c0_20] : memref<48x256xbf16, #tpu.memory_space<vmem>>, vector<4x256xbf16>
    tpu.vector_store %arg7[%c8, %c0_20], %20 {strides = array<i32>} : memref<48x256xbf16, #tpu.memory_space<vmem>>, vector<4x256xbf16>,
    %c0_21 = arith.constant 0 : index
    %c16 = arith.constant 16 : index
    %22 = vector.load %arg6[%c0_21, %c16] : memref<4x290xbf16, #tpu.memory_space<vmem>>, vector<4x256xbf16>
    %c0_22 = arith.constant 0 : index
    %c0_23 = arith.constant 0 : index
    %23 = vector.load %arg4[%c0_22, %c0_23] : memref<3x256xbf16, #tpu.memory_space<vmem>>, vector<1x256xbf16>
    %24 = vector.broadcast %23 : vector<1x256xbf16> to vector<4x256xbf16>
    %25 = arith.mulf %22, %24 : vector<4x256xbf16>
    %c12 = arith.constant 12 : index
    %c0_24 = arith.constant 0 : index
    %26 = vector.load %arg7[%c12, %c0_24] : memref<48x256xbf16, #tpu.memory_space<vmem>>, vector<4x256xbf16>
    tpu.vector_store %arg7[%c12, %c0_24], %25 {strides = array<i32>} : memref<48x256xbf16, #tpu.memory_space<vmem>>, vector<4x256xbf16>,
    %c0_25 = arith.constant 0 : index
    %c17_26 = arith.constant 17 : index
    %27 = vector.load %arg6[%c0_25, %c17_26] : memref<4x290xbf16, #tpu.memory_space<vmem>>, vector<4x256xbf16>
    %c16_27 = arith.constant 16 : index
    %c0_28 = arith.constant 0 : index
    %28 = vector.load %arg7[%c16_27, %c0_28] : memref<48x256xbf16, #tpu.memory_space<vmem>>, vector<4x256xbf16>
    tpu.vector_store %arg7[%c16_27, %c0_28], %27 {strides = array<i32>} : memref<48x256xbf16, #tpu.memory_space<vmem>>, vector<4x256xbf16>,
    %c0_29 = arith.constant 0 : index
    %c18 = arith.constant 18 : index
    %29 = vector.load %arg6[%c0_29, %c18] : memref<4x290xbf16, #tpu.memory_space<vmem>>, vector<4x256xbf16>
    %c2_30 = arith.constant 2 : index
    %c0_31 = arith.constant 0 : index
    %30 = vector.load %arg4[%c2_30, %c0_31] : memref<3x256xbf16, #tpu.memory_space<vmem>>, vector<1x256xbf16>
    %31 = vector.broadcast %30 : vector<1x256xbf16> to vector<4x256xbf16>
    %32 = arith.mulf %29, %31 : vector<4x256xbf16>
    %c20 = arith.constant 20 : index
    %c0_32 = arith.constant 0 : index
    %33 = vector.load %arg7[%c20, %c0_32] : memref<48x256xbf16, #tpu.memory_space<vmem>>, vector<4x256xbf16>
    tpu.vector_store %arg7[%c20, %c0_32], %32 {strides = array<i32>} : memref<48x256xbf16, #tpu.memory_space<vmem>>, vector<4x256xbf16>,
    %c0_33 = arith.constant 0 : index
    %c32 = arith.constant 32 : index
    %34 = vector.load %arg6[%c0_33, %c32] : memref<4x290xbf16, #tpu.memory_space<vmem>>, vector<4x256xbf16>
    %c0_34 = arith.constant 0 : index
    %c0_35 = arith.constant 0 : index
    %35 = vector.load %arg4[%c0_34, %c0_35] : memref<3x256xbf16, #tpu.memory_space<vmem>>, vector<1x256xbf16>
    %36 = vector.broadcast %35 : vector<1x256xbf16> to vector<4x256xbf16>
    %37 = arith.mulf %34, %36 : vector<4x256xbf16>
    %c24 = arith.constant 24 : index
    %c0_36 = arith.constant 0 : index
    %38 = vector.load %arg7[%c24, %c0_36] : memref<48x256xbf16, #tpu.memory_space<vmem>>, vector<4x256xbf16>
    tpu.vector_store %arg7[%c24, %c0_36], %37 {strides = array<i32>} : memref<48x256xbf16, #tpu.memory_space<vmem>>, vector<4x256xbf16>,
    %c0_37 = arith.constant 0 : index
    %c33 = arith.constant 33 : index
    %39 = vector.load %arg6[%c0_37, %c33] : memref<4x290xbf16, #tpu.memory_space<vmem>>, vector<4x256xbf16>
    %c28 = arith.constant 28 : index
    %c0_38 = arith.constant 0 : index
    %40 = vector.load %arg7[%c28, %c0_38] : memref<48x256xbf16, #tpu.memory_space<vmem>>, vector<4x256xbf16>
    tpu.vector_store %arg7[%c28, %c0_38], %39 {strides = array<i32>} : memref<48x256xbf16, #tpu.memory_space<vmem>>, vector<4x256xbf16>,
    %c0_39 = arith.constant 0 : index
    %c34 = arith.constant 34 : index
    %41 = vector.load %arg6[%c0_39, %c34] : memref<4x290xbf16, #tpu.memory_space<vmem>>, vector<4x256xbf16>
    %c2_40 = arith.constant 2 : index
    %c0_41 = arith.constant 0 : index
    %42 = vector.load %arg4[%c2_40, %c0_41] : memref<3x256xbf16, #tpu.memory_space<vmem>>, vector<1x256xbf16>
    %43 = vector.broadcast %42 : vector<1x256xbf16> to vector<4x256xbf16>
    %44 = arith.mulf %41, %43 : vector<4x256xbf16>
    %c32_42 = arith.constant 32 : index
    %c0_43 = arith.constant 0 : index
    %45 = vector.load %arg7[%c32_42, %c0_43] : memref<48x256xbf16, #tpu.memory_space<vmem>>, vector<4x256xbf16>
    tpu.vector_store %arg7[%c32_42, %c0_43], %44 {strides = array<i32>} : memref<48x256xbf16, #tpu.memory_space<vmem>>, vector<4x256xbf16>,
    %c0_44 = arith.constant 0 : index
    %c0_45 = arith.constant 0 : index
    %46 = vector.load %arg2[%c0_44, %c0_45] : memref<8x48xbf16, #tpu.memory_space<vmem>>, vector<8x48xbf16>
    %c0_46 = arith.constant 0 : index
    %c0_47 = arith.constant 0 : index
    %47 = vector.load %arg7[%c0_46, %c0_47] : memref<48x256xbf16, #tpu.memory_space<vmem>>, vector<48x256xbf16>
    %cst_48 = arith.constant dense<0.000000e+00> : vector<8x256xf32>
    %48 = tpu.matmul %46, %47, %cst_48 {dimension_numbers = #tpu.dot_dimension_numbers<[1], [0], [0], [1], [0, 0, 1, 1], [], []>} : vector<8x48xbf16>, vector<48x256xbf16>, vector<8x256xf32> -> vector<8x256xf32>
    %c0_49 = arith.constant 0 : index
    %c0_50 = arith.constant 0 : index
    %49 = vector.load %arg3[%c0_49, %c0_50] : memref<8x1xf32, #tpu.memory_space<vmem>>, vector<8x1xf32>
    %50 = vector.broadcast %49 : vector<8x1xf32> to vector<8x256xf32>
    %51 = arith.addf %48, %50 : vector<8x256xf32>
    %cst_51 = arith.constant 0.000000e+00 : f32
    %52 = vector.broadcast %cst_51 : f32 to vector<8x256xf32>
    %53 = arith.maximumf %51, %52 : vector<8x256xf32>
    %54 = arith.truncf %53 : vector<8x256xf32> to vector<8x256xbf16>
    %c0_52 = arith.constant 0 : index
    %c0_53 = arith.constant 0 : index
    %c0_54 = arith.constant 0 : index
    %55 = vector.load %arg5[%c0_52, %c0_53, %c0_54] : memref<1x8x256xbf16, #tpu.memory_space<vmem>>, vector<1x8x256xbf16>
    %56 = vector.shape_cast %55 : vector<1x8x256xbf16> to vector<8x256xbf16>
    %57 = vector.shape_cast %54 : vector<8x256xbf16> to vector<1x8x256xbf16>
    tpu.vector_store %arg5[%c0_52, %c0_53, %c0_54], %57 {strides = array<i32>} : memref<1x8x256xbf16, #tpu.memory_space<vmem>>, vector<1x8x256xbf16>,
    return
  }
  func.func @transform_0(%arg0: i32) -> (i32, i32, i32) {
    %c0_i32 = arith.constant 0 : i32
    %c0_i32_0 = arith.constant 0 : i32
    %c0_i32_1 = arith.constant 0 : i32
    return %arg0, %c0_i32, %c0_i32_0 : i32, i32, i32
  }
  func.func @transform_1(%arg0: i32) -> (i32, i32) {
    %c0_i32 = arith.constant 0 : i32
    %c0_i32_0 = arith.constant 0 : i32
    %c0_i32_1 = arith.constant 0 : i32
    return %c0_i32, %c0_i32_0 : i32, i32
  }
  func.func @transform_2(%arg0: i32) -> (i32, i32) {
    %c0_i32 = arith.constant 0 : i32
    %c0_i32_0 = arith.constant 0 : i32
    %c0_i32_1 = arith.constant 0 : i32
    return %c0_i32, %c0_i32_0 : i32, i32
  }
  func.func @transform_3(%arg0: i32) -> (i32, i32) {
    %c0_i32 = arith.constant 0 : i32
    %c0_i32_0 = arith.constant 0 : i32
    %c0_i32_1 = arith.constant 0 : i32
    return %c0_i32, %c0_i32_0 : i32, i32
  }
  func.func @transform_4(%arg0: i32) -> (i32, i32, i32) {
    %c0_i32 = arith.constant 0 : i32
    %c0_i32_0 = arith.constant 0 : i32
    %c0_i32_1 = arith.constant 0 : i32
    return %arg0, %c0_i32, %c0_i32_0 : i32, i32, i32
  }
}

</mosaic_0001>

<llo_original>
// kernel: tpu_custom_call.1
$region0: #{tpu_custom_call.1}
  #allocation0 [shape = 'u32[]', space=smem, size = 0x4, offset = 0x4, fixed_abs, tag = 'smem constant byte address 0x4 - core index']
  #allocation1 [shape = 'u32[72,128]{1,0:T(1,128)}', space=vmem, size = 0x9000, scoped, tag = 'internal scratch']
  #allocation2 [shape = 'bf16[4,290]{1,0:T(4,128)(2,1)}', space=vmem, size = 0xc00, scoped, tag = 'scratch operand']
  #allocation3 [shape = 'bf16[48,256]{1,0:T(8,128)(2,1)}', space=vmem, size = 0x6000, scoped, tag = 'scratch operand']
  %s0 = inlined_call_operand.hbm [shape: f32[2,4,256], index: 0, kind: input, shape index: {}]
  %s1 = inlined_call_operand.vmem [shape: bf16[8,48], index: 1, kind: input, shape index: {}]
  %s2 = inlined_call_operand.vmem [shape: f32[8,1], index: 2, kind: input, shape index: {}]
  %s3 = inlined_call_operand.vmem [shape: bf16[3,256], index: 3, kind: input, shape index: {}]
  %s4 = inlined_call_operand.hbm [shape: bf16[2,8,256], index: 4, kind: output, shape index: {}]
  %s5 = sld [smem:[#allocation0]]
  $region53: #{tpu_custom_call.1} parent=0
    _
  %s7 = ssub.s32 1, %s5
  %s8 = scalar_select 0, %s7, %s5
  $region1: #{tpu_custom_call.1} parent=0
    #allocation4 [shape = 'u8[8192]{0}', space=vmem, size = 0x2000, scoped, tag = 'input window, operand 0']
    #allocation5 [shape = 's32[2]{0}', space=sflag, size = 0x8, scoped, tag = 'scoped memory for tpu_custom_call.1']
    #allocation6 [shape = 's32[2]{0}', space=sflag, size = 0x8, scoped, tag = 'scoped memory for tpu_custom_call.1']
    #allocation7 [shape = 'u8[8192]{0}', space=vmem, size = 0x2000, scoped, tag = 'output window, operand 0']
    %9 = vsyncpa [#allocation5], 0
    %s10 = scalar_lea.sflag [#allocation5], 1
    %11 = vsyncpa %s10, 0
    %12 = vsyncpa [#allocation6], 0
    %s13 = scalar_lea.sflag [#allocation6], 1
    %14 = vsyncpa %s13, 0
    loop: start=0, step=1, limit=4
    $region2: #{tpu_custom_call.1} parent=1 // loop_pre_header
      _
    $region3: #{tpu_custom_call.1} parent=1 // loop_header
      %s16 = sphi 0, %s20
      %p17 = scmp.ge.s32.totalorder %s16, 4
      %s26 = sphi 0, %s28
      %s29 = sphi 0, %s26
      %s30 = sphi 0, %s29
      %s46 = sphi 0, %s30
      %s50 = sphi 0, %s50
      %s52 = sphi 0, %s50
      %s53 = sphi 0, %s52
      %s67 = sphi 0, %s53
      %s71 = sphi 0, %s71
      %s73 = sphi 0, %s71
      %s74 = sphi 0, %s73
      %s88 = sphi 0, %s74
      %s92 = sphi 0, %s92
      %s94 = sphi 0, %s92
      %s95 = sphi 0, %s94
      %s109 = sphi 0, %s95
      %s115 = sphi 0, %s117
      %s118 = sphi 0, %s115
      %s119 = sphi 0, %s118
      %s135 = sphi 0, %s119
    $region4: #{tpu_custom_call.1} parent=1 // loop_header_branch
      %19 = sbr.rel (%p17) target = $region8
    $region5: #{tpu_custom_call.1} parent=1 // loop_body
      %s21 = ssub.s32 %s16, 1
      %s22 = ssub.s32 %s16, 2
      %s23 = sadd.s32 %s16, 1
      %s24 = ssub.s32 %s16, %s23
      %p25 = scmp.eq.s32.totalorder %s24, 0
      %s27 = sadd.s32 %s26, 1
      %s28 = scalar_select %p25, %s26, %s27
      %p31 = pneg %p25
      %p32 = scmp.eq.s32.totalorder %s16, 1
      %p33 = por %p31, %p32
      %p34 = scmp.ne.s32.totalorder %s26, %s29
      %p35 = scmp.eq.s32.totalorder %s16, 0
      %p36 = por %p34, %p35
      %p37 = scmp.ne.s32.totalorder %s26, %s29
      %p38 = scmp.eq.s32.totalorder %s21, 1
      %p39 = por %p37, %p38
      %p40 = scmp.ne.s32.totalorder %s29, %s30
      %p41 = scmp.eq.s32.totalorder %s21, 0
      %p42 = por %p40, %p41
      %p43 = scmp.ne.s32.totalorder %s29, %s30
      %p44 = scmp.eq.s32.totalorder %s22, 1
      %p45 = por %p43, %p44
      %p47 = scmp.ne.s32.totalorder %s30, %s46
      %p48 = scmp.eq.s32.totalorder %s22, 0
      %p49 = por %p47, %p48
      %s51 = sadd.s32 %s50, 1
      %p54 = scmp.eq.s32.totalorder %s16, 1
      %p55 = scmp.ne.s32.totalorder %s50, %s52
      %p56 = scmp.eq.s32.totalorder %s16, 0
      %p57 = por %p55, %p56
      %p58 = scmp.ne.s32.totalorder %s50, %s52
      %p59 = scmp.eq.s32.totalorder %s21, 1
      %p60 = por %p58, %p59
      %p61 = scmp.ne.s32.totalorder %s52, %s53
      %p62 = scmp.eq.s32.totalorder %s21, 0
      %p63 = por %p61, %p62
      %p64 = scmp.ne.s32.totalorder %s52, %s53
      %p65 = scmp.eq.s32.totalorder %s22, 1
      %p66 = por %p64, %p65
      %p68 = scmp.ne.s32.totalorder %s53, %s67
      %p69 = scmp.eq.s32.totalorder %s22, 0
      %p70 = por %p68, %p69
      %s72 = sadd.s32 %s71, 1
      %p75 = scmp.eq.s32.totalorder %s16, 1
      %p76 = scmp.ne.s32.totalorder %s71, %s73
      %p77 = scmp.eq.s32.totalorder %s16, 0
      %p78 = por %p76, %p77
      %p79 = scmp.ne.s32.totalorder %s71, %s73
      %p80 = scmp.eq.s32.totalorder %s21, 1
      %p81 = por %p79, %p80
      %p82 = scmp.ne.s32.totalorder %s73, %s74
      %p83 = scmp.eq.s32.totalorder %s21, 0
      %p84 = por %p82, %p83
      %p85 = scmp.ne.s32.totalorder %s73, %s74
      %p86 = scmp.eq.s32.totalorder %s22, 1
      %p87 = por %p85, %p86
      %p89 = scmp.ne.s32.totalorder %s74, %s88
      %p90 = scmp.eq.s32.totalorder %s22, 0
      %p91 = por %p89, %p90
      %s93 = sadd.s32 %s92, 1
      %p96 = scmp.eq.s32.totalorder %s16, 1
      %p97 = scmp.ne.s32.totalorder %s92, %s94
      %p98 = scmp.eq.s32.totalorder %s16, 0
      %p99 = por %p97, %p98
      %p100 = scmp.ne.s32.totalorder %s92, %s94
      %p101 = scmp.eq.s32.totalorder %s21, 1
      %p102 = por %p100, %p101
      %p103 = scmp.ne.s32.totalorder %s94, %s95
      %p104 = scmp.eq.s32.totalorder %s21, 0
      %p105 = por %p103, %p104
      %p106 = scmp.ne.s32.totalorder %s94, %s95
      %p107 = scmp.eq.s32.totalorder %s22, 1
      %p108 = por %p106, %p107
      %p110 = scmp.ne.s32.totalorder %s95, %s109
      %p111 = scmp.eq.s32.totalorder %s22, 0
      %p112 = por %p110, %p111
      %s113 = ssub.s32 %s16, %s23
      %p114 = scmp.eq.s32.totalorder %s113, 0
      %s116 = sadd.s32 %s115, 1
      %s117 = scalar_select %p114, %s115, %s116
      %p120 = pneg %p114
      %p121 = scmp.eq.s32.totalorder %s16, 1
      %p122 = por %p120, %p121
      %p123 = scmp.ne.s32.totalorder %s115, %s118
      %p124 = scmp.eq.s32.totalorder %s16, 0
      %p125 = por %p123, %p124
      %p126 = scmp.ne.s32.totalorder %s115, %s118
      %p127 = scmp.eq.s32.totalorder %s21, 1
      %p128 = por %p126, %p127
      %p129 = scmp.ne.s32.totalorder %s118, %s119
      %p130 = scmp.eq.s32.totalorder %s21, 0
      %p131 = por %p129, %p130
      %p132 = scmp.ne.s32.totalorder %s118, %s119
      %p133 = scmp.eq.s32.totalorder %s22, 1
      %p134 = por %p132, %p133
      %p136 = scmp.ne.s32.totalorder %s119, %s135
      %p137 = scmp.eq.s32.totalorder %s22, 0
      %p138 = por %p136, %p137
      %p139 = scmp.le.s32.totalorder 1, %s16
      %p140 = scmp.lt.s32.totalorder %s16, 3
      %p141 = pnand %p139, %p140
      %p142 = pneg %p141
      // Predicated region
      $region9: #{tpu_custom_call.1} parent=5 // pred_check
        _
      $region10: #{tpu_custom_call.1} parent=5 // pred_check_branch
        %144 = sbr.rel (%p141) target = $region12
      $region11: #{tpu_custom_call.1} parent=5 // pred_region
        %s145 = ssub.s32 %s16, 1
        // Predicated region
        $region13: #{tpu_custom_call.1} parent=11 // pred_check
          %p146 = pneg %p63
        $region14: #{tpu_custom_call.1} parent=11 // pred_check_branch
          %148 = sbr.rel (%p146) target = $region16
        $region15: #{tpu_custom_call.1} parent=11 // pred_region
          _
        $region16: #{tpu_custom_call.1} parent=11 // pred_fallthru
          _
        // Predicated region
        $region17: #{tpu_custom_call.1} parent=11 // pred_check
          %p149 = pneg %p84
        $region18: #{tpu_custom_call.1} parent=11 // pred_check_branch
          %151 = sbr.rel (%p149) target = $region20
        $region19: #{tpu_custom_call.1} parent=11 // pred_region
          _
        $region20: #{tpu_custom_call.1} parent=11 // pred_fallthru
          _
        // Predicated region
        $region21: #{tpu_custom_call.1} parent=11 // pred_check
          %p152 = pneg %p105
        $region22: #{tpu_custom_call.1} parent=11 // pred_check_branch
          %154 = sbr.rel (%p152) target = $region24
        $region23: #{tpu_custom_call.1} parent=11 // pred_region
          _
        $region24: #{tpu_custom_call.1} parent=11 // pred_fallthru
          _
      $region12: #{tpu_custom_call.1} parent=5 // pred_fallthru
        _
      %p155 = scmp.lt.s32.totalorder %s16, 2
      // Predicated region
      $region25: #{tpu_custom_call.1} parent=5 // pred_check
        %p156 = pneg %p155
      $region26: #{tpu_custom_call.1} parent=5 // pred_check_branch
        %158 = sbr.rel (%p156) target = $region28
      $region27: #{tpu_custom_call.1} parent=5 // pred_region
        // Predicated region
        $region29: #{tpu_custom_call.1} parent=27 // pred_check
          %p159 = pneg %p36
        $region30: #{tpu_custom_call.1} parent=27 // pred_check_branch
          %161 = sbr.rel (%p159) target = $region32
        $region31: #{tpu_custom_call.1} parent=27 // pred_region
          %s162 = sand.u32 %s26, 1
          %s163 = scalar_lea.sflag [#allocation5], %s162
          %s164 = sand.u32 %s26, 1
          %s165 = smul.addr %s164, 8
          %s166 = scalar_lea.vmem [#allocation4], %s165
          %168 = vsyncadd %s163, 0
          %s169 = smul.addr %s16, 2
          %s170 = smul.addr %s169, 4
          %s171 = scalar_lea.hbm %s0, %s170
          %s173 = sshll.u32 %s171, 4
          %s174 = int_to_ptr.hbm [resolvable:$true] %s173
          %s175 = sshll.u32 %s166, 4
          %s176 = int_to_ptr.vmem [resolvable:$true] %s175
          %178 = dma.hbm_to_vmem [thread:$0]  %s174, 128, %s176, %s163
        $region32: #{tpu_custom_call.1} parent=27 // pred_fallthru
          _
      $region28: #{tpu_custom_call.1} parent=5 // pred_fallthru
        _
      %p179 = scmp.le.s32.totalorder 1, %s16
      %p180 = scmp.lt.s32.totalorder %s16, 3
      %p181 = pnand %p179, %p180
      %p182 = pneg %p181
      // Predicated region
      $region33: #{tpu_custom_call.1} parent=5 // pred_check
        _
      $region34: #{tpu_custom_call.1} parent=5 // pred_check_branch
        %184 = sbr.rel (%p181) target = $region36
      $region35: #{tpu_custom_call.1} parent=5 // pred_region
        %s185 = ssub.s32 %s16, 1
        %s186 = sand.u32 %s29, 1
        %s187 = scalar_lea.sflag [#allocation5], %s186
        %s188 = sand.u32 %s29, 1
        %s189 = smul.addr %s188, 8
        %s190 = scalar_lea.vmem [#allocation4], %s189
        // Predicated region
        $region37: #{tpu_custom_call.1} parent=35 // pred_check
          %p191 = pneg %p42
        $region38: #{tpu_custom_call.1} parent=35 // pred_check_branch
          %193 = sbr.rel (%p191) target = $region40
        $region39: #{tpu_custom_call.1} parent=35 // pred_region
          %195 = dma.done %s187, 128
        $region40: #{tpu_custom_call.1} parent=35 // pred_fallthru
          _
        %s196 = sand.u32 %s29, 1
        %s197 = scalar_lea.sflag [#allocation5], %s196
        %s198 = sand.u32 %s29, 1
        %s199 = smul.addr %s198, 8
        %s200 = scalar_lea.vmem [#allocation4], %s199
        %p201 = pneg %p42
        %p202 = pneg %p39
        %p203 = pneg %p63
        %p204 = pneg %p60
        %p205 = pneg %p84
        %p206 = pneg %p81
        %p207 = pneg %p105
        %p208 = pneg %p102
        %p209 = pneg %p131
        %p210 = pneg %p128
        %s211 = sand.u32 %s118, 1
        %s212 = scalar_lea.sflag [#allocation6], %s211
        %s213 = sand.u32 %s118, 1
        %s214 = smul.addr %s213, 8
        %s215 = scalar_lea.vmem [#allocation7], %s214
        %vm217 = vcmask 132096
        %218 = vst.msk [vmem:[#allocation2] sm:$0x3] %vm217, 0
        %vm219 = vcmask 271496
        %220 = vst.msk [vmem:[#allocation2 + $0x4] sm:$0x3] %vm219, 0
        %v221 = vld [vmem:[%s190] sm:$0xff]
        %223 = vst [vmem:[#allocation1] ss:$2 sm:$0xff] %v221
        %v224 = vld.sshfl [vmem:[#allocation1] sm:$0xff pattern:$0x75316420]
        %v225 = vld.sshfl [vmem:[#allocation1 + $0x8] sm:$0xff pattern:$0x75316420]
        %v228 = vpack.c.bf16 %v225, %v224
        %v230 = vrot.slane %v228, 2
        %vm231 = vcmask 1041408
        %v234 = vsel %vm231, %v228, %v230
        %236 = vrot.lane.b32.xlu0 %v234, 17
        %v237 = vpop.permute.xlu0 %236
        %v238 = vrot.slane %v237, 6
        %vm239 = vcmask 138240
        %v240 = vsel %vm239, %v238, %v237
        %vm242 = vcmask 1041544
        %vm243 = vcmask 1043458
        %vm244 = vmor %vm243, %vm242
        %vm245 = vcmask 136196
        %vm246 = vmor %vm245, %vm244
        %247 = vst.msk [vmem:[#allocation2] sm:$0x3f] %vm246, %v240
        %248 = vst [vmem:[#allocation3 + $0x20] sm:$0xcc] 0
        %249 = vst [vmem:[#allocation3 + $0x28] sm:$0xff] 0
        %v250 = vld [vmem:[#allocation2] sm:$0xf]
        %v251 = vld [vmem:[%s3] sm:$0x5]
        %253 = vst [vmem:[#allocation1] ss:$4 sm:$0xff] %v251
        %v254 = vld.sshfl [vmem:[#allocation1] sm:$0xff pattern:$0x73625140]
        %v255 = vld.sshfl [vmem:[#allocation1 + $0x8] sm:$0xff pattern:$0x73625140]
        %v256 = vpack.i.b16 %v254, %v254
        %v258 = vperm.slane %v256, 0
        %v259 = vpack.i.b16 %v255, %v255
        %v261 = vperm.slane %v259, 0
        %v262 = vunpack.c.l.bf16 %v250
        %v263 = vunpack.c.l.bf16 %v258
        %v264 = vunpack.c.l.bf16 %v261
        %v267 = vrot.slane %v264, 4
        %vm268 = vcmask 1043456
        %v269 = vsel %vm268, %v263, %v267
        %v271 = vmul.f32 %v262, %v269
        %273 = vst [vmem:[#allocation1] ss:$2 sm:$0xff] %v271
        %v274 = vld.sshfl [vmem:[#allocation1] sm:$0xff pattern:$0x75316420]
        %v275 = vld.sshfl [vmem:[#allocation1 + $0x8] sm:$0xff pattern:$0x75316420]
        %v278 = vpack.c.bf16 %v275, %v274
        %279 = vst [vmem:[#allocation3] sm:$0x33] %v278
        %v280 = vld [vmem:[#allocation2] sm:$0x3f]
        %s282 = scalar_lea.vmem [#allocation1], 1
        %283 = vst [vmem:[%s282] ss:$2 sm:$0xff] %v280
        %v284 = vld.sshfl [vmem:[#allocation1] sm:$0xff pattern:$0x75643120]
        %v286 = vld.sshfl [vmem:[#allocation1 + $0x8] sm:$0xff pattern:$0x75643120]
        %288 = vrot.lane.b32.xlu0 %v284, 127
        %v289 = vpop.permute.xlu0 %288
        %290 = vrot.lane.b32.xlu0 %v286, 127
        %v291 = vpop.permute.xlu0 %290
        %v292 = vrot.slane %v289, 4
        %v293 = vrot.slane %v291, 4
        %vm294 = vcmask 1043456
        %v295 = vsel %vm294, %v292, %v293
        %vm296 = vcmask 1039360
        %v297 = vsel %vm296, %v289, %v295
        %299 = vst [vmem:[#allocation3] sm:$0xcc] %v297
        %v300 = vld [vmem:[#allocation2] sm:$0x3f]
        %v301 = vld [vmem:[%s3] sm:$0xa]
        %303 = vst [vmem:[#allocation1] ss:$4 sm:$0xff] %v301
        %v304 = vld.sshfl [vmem:[#allocation1] sm:$0xff pattern:$0x73625140]
        %v305 = vld.sshfl [vmem:[#allocation1 + $0x8] sm:$0xff pattern:$0x73625140]
        %v306 = vpack.i.b16 %v304, %v304
        %v308 = vperm.slane %v306, 1
        %v309 = vpack.i.b16 %v305, %v305
        %v311 = vperm.slane %v309, 1
        %v312 = vunpack.c.l.bf16 %v300
        %v313 = vunpack.c.h.bf16 %v300
        %v314 = vunpack.c.l.bf16 %v308
        %v315 = vunpack.c.l.bf16 %v311
        %v318 = vrot.slane %v315, 4
        %v319 = vsel %vm268, %v314, %v318
        %320 = vrot.lane.b32.xlu0 %v319, 2
        %v321 = vpop.permute.xlu0 %320
        %v322 = vrot.slane %v321, 4
        %vm323 = vcmask 15360
        %v324 = vsel %vm323, %v322, %v321
        %v327 = vmul.f32 %v312, %v324
        %v328 = vmul.f32 %v313, %v322
        %331 = vst [vmem:[#allocation1] ss:$2 sm:$0xff] %v327
        %s332 = scalar_lea.vmem [#allocation1], 16
        %333 = vst [vmem:[%s332] ss:$2 sm:$0xff] %v328
        %v334 = vld.sshfl [vmem:[#allocation1] sm:$0xff pattern:$0x75316420]
        %v335 = vld.sshfl [vmem:[#allocation1 + $0x8] sm:$0xff pattern:$0x75316420]
        %v336 = vld.sshfl [vmem:[#allocation1 + $0x10] sm:$0xff pattern:$0x75316420]
        %v340 = vpack.c.bf16 %v335, %v334
        %v341 = vpack.c.bf16 %v336, %v336
        %344 = vrot.lane.b32.xlu0 %v340, 126
        %v345 = vpop.permute.xlu0 %344
        %346 = vrot.lane.b32.xlu0 %v341, 126
        %v347 = vpop.permute.xlu0 %346
        %v348 = vrot.slane %v345, 4
        %v349 = vrot.slane %v347, 4
        %v350 = vsel %vm294, %v348, %v349
        %vm351 = vcmask 1031168
        %v352 = vsel %vm351, %v345, %v350
        %354 = vst [vmem:[#allocation3 + $0x8] sm:$0x33] %v352
        %v355 = vld [vmem:[#allocation2] sm:$0x3f]
        %v356 = vld [vmem:[%s3] sm:$0x5]
        %358 = vst [vmem:[#allocation1] ss:$4 sm:$0xff] %v356
        %v359 = vld.sshfl [vmem:[#allocation1] sm:$0xff pattern:$0x73625140]
        %v360 = vld.sshfl [vmem:[#allocation1 + $0x8] sm:$0xff pattern:$0x73625140]
        %v361 = vpack.i.b16 %v359, %v359
        %v363 = vperm.slane %v361, 0
        %v364 = vpack.i.b16 %v360, %v360
        %v366 = vperm.slane %v364, 0
        %v367 = vunpack.c.l.bf16 %v355
        %v368 = vunpack.c.h.bf16 %v355
        %v369 = vunpack.c.l.bf16 %v363
        %v370 = vunpack.c.l.bf16 %v366
        %v373 = vrot.slane %v370, 4
        %v374 = vsel %vm268, %v369, %v373
        %375 = vrot.lane.b32.xlu0 %v374, 16
        %v376 = vpop.permute.xlu0 %375
        %v377 = vrot.slane %v376, 4
        %vm378 = vcmask 130048
        %v379 = vsel %vm378, %v377, %v376
        %v382 = vmul.f32 %v367, %v379
        %v383 = vmul.f32 %v368, %v377
        %386 = vst [vmem:[#allocation1] ss:$2 sm:$0xff] %v382
        %s387 = scalar_lea.vmem [#allocation1], 16
        %388 = vst [vmem:[%s387] ss:$2 sm:$0xff] %v383
        %v389 = vld.sshfl [vmem:[#allocation1] sm:$0xff pattern:$0x75316420]
        %v390 = vld.sshfl [vmem:[#allocation1 + $0x8] sm:$0xff pattern:$0x75316420]
        %v391 = vld.sshfl [vmem:[#allocation1 + $0x10] sm:$0xff pattern:$0x75316420]
        %v395 = vpack.c.bf16 %v390, %v389
        %v396 = vpack.c.bf16 %v391, %v391
        %v399 = vrot.slane %v395, 6
        %v400 = vrot.slane %v396, 6
        %401 = vrot.lane.b32.xlu0 %v399, 112
        %v402 = vpop.permute.xlu0 %401
        %403 = vrot.lane.b32.xlu0 %v400, 112
        %v404 = vpop.permute.xlu0 %403
        %v405 = vrot.slane %v402, 4
        %v406 = vrot.slane %v404, 4
        %v407 = vsel %vm294, %v405, %v406
        %vm408 = vcmask 916480
        %v409 = vsel %vm408, %v402, %v407
        %411 = vst [vmem:[#allocation3 + $0x8] sm:$0xcc] %v409
        %v412 = vld [vmem:[#allocation2] sm:$0x3f]
        %414 = vst [vmem:[#allocation1] ss:$2 sm:$0xff] %v412
        %v415 = vld.sshfl [vmem:[#allocation1] sm:$0xff pattern:$0x75643120]
        %v417 = vld.sshfl [vmem:[#allocation1 + $0x8] sm:$0xff pattern:$0x75643120]
        %419 = vrot.lane.b32.xlu0 %v415, 111
        %v420 = vpop.permute.xlu0 %419
        %421 = vrot.lane.b32.xlu0 %v417, 111
        %v422 = vpop.permute.xlu0 %421
        %v423 = vrot.slane %v420, 4
        %v424 = vrot.slane %v422, 4
        %v425 = vsel %vm294, %v423, %v424
        %vm426 = vcmask 908288
        %v427 = vsel %vm426, %v420, %v425
        %429 = vst [vmem:[#allocation3 + $0x10] sm:$0x33] %v427
        %v430 = vld [vmem:[#allocation2] sm:$0x3f]
        %v431 = vld [vmem:[%s3] sm:$0xa]
        %433 = vst [vmem:[#allocation1] ss:$4 sm:$0xff] %v431
        %v434 = vld.sshfl [vmem:[#allocation1] sm:$0xff pattern:$0x73625140]
        %v435 = vld.sshfl [vmem:[#allocation1 + $0x8] sm:$0xff pattern:$0x73625140]
        %v436 = vpack.i.b16 %v434, %v434
        %v438 = vperm.slane %v436, 1
        %v439 = vpack.i.b16 %v435, %v435
        %v441 = vperm.slane %v439, 1
        %v442 = vunpack.c.l.bf16 %v430
        %v443 = vunpack.c.h.bf16 %v430
        %v444 = vunpack.c.l.bf16 %v438
        %v445 = vunpack.c.l.bf16 %v441
        %v448 = vrot.slane %v445, 4
        %v449 = vsel %vm268, %v444, %v448
        %450 = vrot.lane.b32.xlu0 %v449, 18
        %v451 = vpop.permute.xlu0 %450
        %v452 = vrot.slane %v451, 4
        %vm453 = vcmask 146432
        %v454 = vsel %vm453, %v452, %v451
        %v457 = vmul.f32 %v442, %v454
        %v458 = vmul.f32 %v443, %v452
        %461 = vst [vmem:[#allocation1] ss:$2 sm:$0xff] %v457
        %s462 = scalar_lea.vmem [#allocation1], 16
        %463 = vst [vmem:[%s462] ss:$2 sm:$0xff] %v458
        %v464 = vld.sshfl [vmem:[#allocation1] sm:$0xff pattern:$0x75316420]
        %v465 = vld.sshfl [vmem:[#allocation1 + $0x8] sm:$0xff pattern:$0x75316420]
        %v466 = vld.sshfl [vmem:[#allocation1 + $0x10] sm:$0xff pattern:$0x75316420]
        %v470 = vpack.c.bf16 %v465, %v464
        %v471 = vpack.c.bf16 %v466, %v466
        %v474 = vrot.slane %v470, 6
        %v475 = vrot.slane %v471, 6
        %476 = vrot.lane.b32.xlu0 %v474, 110
        %v477 = vpop.permute.xlu0 %476
        %478 = vrot.lane.b32.xlu0 %v475, 110
        %v479 = vpop.permute.xlu0 %478
        %v480 = vrot.slane %v477, 4
        %v481 = vrot.slane %v479, 4
        %v482 = vsel %vm294, %v480, %v481
        %vm483 = vcmask 900096
        %v484 = vsel %vm483, %v477, %v482
        %486 = vst [vmem:[#allocation3 + $0x10] sm:$0xcc] %v484
        %v487 = vld [vmem:[#allocation2] sm:$0x3f]
        %v488 = vld [vmem:[%s3] sm:$0x5]
        %490 = vst [vmem:[#allocation1] ss:$4 sm:$0xff] %v488
        %v491 = vld.sshfl [vmem:[#allocation1] sm:$0xff pattern:$0x73625140]
        %v492 = vld.sshfl [vmem:[#allocation1 + $0x8] sm:$0xff pattern:$0x73625140]
        %v493 = vpack.i.b16 %v491, %v491
        %v495 = vperm.slane %v493, 0
        %v496 = vpack.i.b16 %v492, %v492
        %v498 = vperm.slane %v496, 0
        %v499 = vunpack.c.l.bf16 %v487
        %v500 = vunpack.c.h.bf16 %v487
        %v501 = vunpack.c.l.bf16 %v495
        %v502 = vunpack.c.l.bf16 %v498
        %v505 = vrot.slane %v502, 4
        %v506 = vsel %vm268, %v501, %v505
        %507 = vrot.lane.b32.xlu0 %v506, 32
        %v508 = vpop.permute.xlu0 %507
        %v509 = vrot.slane %v508, 4
        %vm510 = vcmask 261120
        %v511 = vsel %vm510, %v509, %v508
        %v514 = vmul.f32 %v499, %v511
        %v515 = vmul.f32 %v500, %v509
        %518 = vst [vmem:[#allocation1] ss:$2 sm:$0xff] %v514
        %s519 = scalar_lea.vmem [#allocation1], 16
        %520 = vst [vmem:[%s519] ss:$2 sm:$0xff] %v515
        %v521 = vld.sshfl [vmem:[#allocation1] sm:$0xff pattern:$0x75316420]
        %v522 = vld.sshfl [vmem:[#allocation1 + $0x8] sm:$0xff pattern:$0x75316420]
        %v523 = vld.sshfl [vmem:[#allocation1 + $0x10] sm:$0xff pattern:$0x75316420]
        %v527 = vpack.c.bf16 %v522, %v521
        %v528 = vpack.c.bf16 %v523, %v523
        %531 = vrot.lane.b32.xlu0 %v527, 96
        %v532 = vpop.permute.xlu0 %531
        %533 = vrot.lane.b32.xlu0 %v528, 96
        %v534 = vpop.permute.xlu0 %533
        %v535 = vrot.slane %v532, 4
        %v536 = vrot.slane %v534, 4
        %v537 = vsel %vm294, %v535, %v536
        %vm538 = vcmask 785408
        %v539 = vsel %vm538, %v532, %v537
        %541 = vst [vmem:[#allocation3 + $0x18] sm:$0x33] %v539
        %v542 = vld [vmem:[#allocation2] sm:$0x3f]
        %s544 = scalar_lea.vmem [#allocation1], 1
        %545 = vst [vmem:[%s544] ss:$2 sm:$0xff] %v542
        %v546 = vld.sshfl [vmem:[#allocation1] sm:$0xff pattern:$0x75643120]
        %v548 = vld.sshfl [vmem:[#allocation1 + $0x8] sm:$0xff pattern:$0x75643120]
        %550 = vrot.lane.b32.xlu0 %v546, 95
        %v551 = vpop.permute.xlu0 %550
        %552 = vrot.lane.b32.xlu0 %v548, 95
        %v553 = vpop.permute.xlu0 %552
        %v554 = vrot.slane %v551, 4
        %v555 = vrot.slane %v553, 4
        %v556 = vsel %vm294, %v554, %v555
        %vm557 = vcmask 777216
        %v558 = vsel %vm557, %v551, %v556
        %560 = vst [vmem:[#allocation3 + $0x18] sm:$0xcc] %v558
        %v561 = vld [vmem:[#allocation2] sm:$0x3f]
        %v562 = vld [vmem:[%s3] sm:$0xa]
        %564 = vst [vmem:[#allocation1] ss:$4 sm:$0xff] %v562
        %v565 = vld.sshfl [vmem:[#allocation1] sm:$0xff pattern:$0x73625140]
        %v566 = vld.sshfl [vmem:[#allocation1 + $0x8] sm:$0xff pattern:$0x73625140]
        %v567 = vpack.i.b16 %v565, %v565
        %v569 = vperm.slane %v567, 1
        %v570 = vpack.i.b16 %v566, %v566
        %v572 = vperm.slane %v570, 1
        %v573 = vunpack.c.l.bf16 %v561
        %v574 = vunpack.c.h.bf16 %v561
        %v575 = vunpack.c.l.bf16 %v569
        %v576 = vunpack.c.l.bf16 %v572
        %v579 = vrot.slane %v576, 4
        %v580 = vsel %vm268, %v575, %v579
        %581 = vrot.lane.b32.xlu0 %v580, 34
        %v582 = vpop.permute.xlu0 %581
        %v583 = vrot.slane %v582, 4
        %vm584 = vcmask 277504
        %v585 = vsel %vm584, %v583, %v582
        %v588 = vmul.f32 %v573, %v585
        %v589 = vmul.f32 %v574, %v583
        %592 = vst [vmem:[#allocation1] ss:$2 sm:$0xff] %v588
        %s593 = scalar_lea.vmem [#allocation1], 16
        %594 = vst [vmem:[%s593] ss:$2 sm:$0xff] %v589
        %v595 = vld.sshfl [vmem:[#allocation1] sm:$0xff pattern:$0x75316420]
        %v596 = vld.sshfl [vmem:[#allocation1 + $0x8] sm:$0xff pattern:$0x75316420]
        %v597 = vld.sshfl [vmem:[#allocation1 + $0x10] sm:$0xff pattern:$0x75316420]
        %v601 = vpack.c.bf16 %v596, %v595
        %v602 = vpack.c.bf16 %v597, %v597
        %605 = vrot.lane.b32.xlu0 %v601, 94
        %v606 = vpop.permute.xlu0 %605
        %607 = vrot.lane.b32.xlu0 %v602, 94
        %v608 = vpop.permute.xlu0 %607
        %v609 = vrot.slane %v606, 4
        %v610 = vrot.slane %v608, 4
        %v611 = vsel %vm294, %v609, %v610
        %vm612 = vcmask 769024
        %v613 = vsel %vm612, %v606, %v611
        %615 = vst [vmem:[#allocation3 + $0x20] sm:$0x33] %v613
        %v616 = vld [vmem:[%s1] sm:$0xf]
        %v617 = vld [vmem:[#allocation3] sm:$0xff]
        %v618 = vld [vmem:[#allocation3 + $0x8] sm:$0xff]
        %v619 = vld [vmem:[#allocation3 + $0x10] sm:$0xff]
        %v620 = vld [vmem:[#allocation3 + $0x18] sm:$0xff]
        %v621 = vld [vmem:[#allocation3 + $0x20] sm:$0xff]
        %v622 = vld [vmem:[#allocation3 + $0x28] sm:$0xff]
        %v623 = vld [vmem:[%s2] sm:$0xff]
        %625 = vset.pattern.permute.xlu0 0
        %626 = vperm.xlu0 %625, %v623
        %v627 = vpop.permute.xlu0 %626
        %v635 = vunpack.c.l.b16 %v617
        %v636 = vunpack.c.h.b16 %v617
        %v637 = vunpack.c.l.b16 %v618
        %v638 = vunpack.c.h.b16 %v618
        %v639 = vunpack.c.l.b16 %v619
        %v640 = vunpack.c.h.b16 %v619
        %v641 = vunpack.c.l.b16 %v620
        %v642 = vunpack.c.h.b16 %v620
        %v643 = vunpack.c.l.b16 %v621
        %v644 = vunpack.c.h.b16 %v621
        %v645 = vunpack.c.l.b16 %v622
        %v646 = vunpack.c.h.b16 %v622
        %v647 = vpack.c.b16 %v637, %v635
        %v648 = vpack.c.b16 %v638, %v636
        %v649 = vpack.c.b16 %v641, %v639
        %v650 = vpack.c.b16 %v642, %v640
        %v651 = vpack.c.b16 %v645, %v643
        %v652 = vpack.c.b16 %v646, %v644
        %vm659 = vcmask 392192
        %v661 = vsel %vm659, %v616, 0
        %663 = vmatpush.bf16.msra.mxu0 0
        %664 = vmatpush.bf16.msra.mxu0 0
        %665 = vmatpush.bf16.msra.mxu0 0
        %666 = vmatpush.bf16.msra.mxu0 0
        %667 = vmatpush.bf16.msra.mxu0 0
        %668 = vmatpush.bf16.msra.mxu0 %v651
        %669 = vmatpush.bf16.msra.mxu0 %v649
        %670 = vmatpush.bf16.msra.mxu0 %v647
        %671 = vmatmul.bf16.gmra.mxu0 %v661
        %v672 = vpop.f32.mrf.mxu0
        %v673 = vadd.f32 %v627, %v672
        %v674 = vpop.f32.mrf.mxu0
        %675 = vdwg.mxu0
        %676 = vmatpush.bf16.msra.mxu0 0
        %677 = vmatpush.bf16.msra.mxu0 0
        %678 = vmatpush.bf16.msra.mxu0 0
        %679 = vmatpush.bf16.msra.mxu0 0
        %680 = vmatpush.bf16.msra.mxu0 0
        %681 = vmatpush.bf16.msra.mxu0 %v652
        %682 = vmatpush.bf16.msra.mxu0 %v650
        %683 = vmatpush.bf16.msra.mxu0 %v648
        %684 = vmatmul.bf16.gmra.mxu0 %v661
        %v685 = vpop.f32.mrf.mxu0
        %v686 = vadd.f32 %v627, %v685
        %v687 = vpop.f32.mrf.mxu0
        %688 = vdwg.mxu0
        %v689 = vmax.f32 %v673, 0.0
        %v690 = vmax.f32 %v686, 0.0
        %v691 = vpack.c.bf16 %v690, %v689
        %692 = vst [vmem:[%s215] sm:$0xff] %v691
        %s693 = sand.u32 %s118, 1
        %s694 = scalar_lea.sflag [#allocation6], %s693
        %s695 = sand.u32 %s118, 1
        %s696 = smul.addr %s695, 8
        %s697 = scalar_lea.vmem [#allocation7], %s696
        // Predicated region
        $region41: #{tpu_custom_call.1} parent=35 // pred_check
          %p698 = pneg %p128
        $region42: #{tpu_custom_call.1} parent=35 // pred_check_branch
          %700 = sbr.rel (%p698) target = $region44
        $region43: #{tpu_custom_call.1} parent=35 // pred_region
          %702 = vsyncadd %s694, 0
          %s703 = smul.addr %s21, 2
          %s704 = smul.addr %s703, 4
          %s705 = scalar_lea.hbm %s4, %s704
          %s707 = sshll.u32 %s697, 4
          %s708 = int_to_ptr.vmem [resolvable:$true] %s707
          %s709 = sshll.u32 %s705, 4
          %s710 = int_to_ptr.hbm [resolvable:$true] %s709
          %712 = dma.vmem_to_hbm [thread:$0]  %s708, 128, %s710, %s694
        $region44: #{tpu_custom_call.1} parent=35 // pred_fallthru
          _
      $region36: #{tpu_custom_call.1} parent=5 // pred_fallthru
        _
      %p713 = scmp.le.s32.totalorder 2, %s16
      // Predicated region
      $region45: #{tpu_custom_call.1} parent=5 // pred_check
        %p714 = pneg %p713
      $region46: #{tpu_custom_call.1} parent=5 // pred_check_branch
        %716 = sbr.rel (%p714) target = $region48
      $region47: #{tpu_custom_call.1} parent=5 // pred_region
        %s717 = ssub.s32 %s16, 2
        // Predicated region
        $region49: #{tpu_custom_call.1} parent=47 // pred_check
          %p718 = pneg %p134
        $region50: #{tpu_custom_call.1} parent=47 // pred_check_branch
          %720 = sbr.rel (%p718) target = $region52
        $region51: #{tpu_custom_call.1} parent=47 // pred_region
          %s721 = sand.u32 %s119, 1
          %s722 = scalar_lea.sflag [#allocation6], %s721
          %s723 = sand.u32 %s119, 1
          %s724 = smul.addr %s723, 8
          %s725 = scalar_lea.vmem [#allocation7], %s724
          %727 = dma.done %s722, 128
        $region52: #{tpu_custom_call.1} parent=47 // pred_fallthru
          _
      $region48: #{tpu_custom_call.1} parent=5 // pred_fallthru
        _
    $region6: #{tpu_custom_call.1} parent=1 // loop_footer
      %s20 = sadd.s32 1, %s16
    $region7: #{tpu_custom_call.1} parent=1 // loop_footer_branch
      %15 = sbr.rel target = $region3
    $region8: #{tpu_custom_call.1} parent=1 // loop_exit
      _
    %728 = vsyncpa [#allocation5], 1
    %s729 = scalar_lea.sflag [#allocation5], 1
    %730 = vsyncpa %s729, 1
    %731 = vsyncpa [#allocation6], 1
    %s732 = scalar_lea.sflag [#allocation6], 1
    %733 = vsyncpa %s732, 1

</llo_original>
